<compile_context>
chip_gen: v6e
topology: v6e:2x2x1
jax: 0.10.0
libtpu: 0.0.40
codegen_flags: <defaults>
</compile_context>

<pallas_src>
import math

import jax
import jax.numpy as jnp
from jax.experimental import pallas as pl
from jax.experimental.pallas import tpu as pltpu

HIDDEN = 128
LANE = 128
ROW_ALIGN = 16  # batch rows padded to a multiple of this (sublane-pair safe)


def _round_up(x, m):
    return ((x + m - 1) // m) * m


# --------------------------------------------------------------------------- #
# Kernel
# --------------------------------------------------------------------------- #
def dqn_mlp_kernel(x_ref, w1_ref, b1_ref, w2_ref, b2_ref, w3_ref, b3_ref, o_ref):
    # Fused 3-layer MLP on one (TM, input_dim) batch tile.
    # fc1/fc2: bf16 x bf16 -> f32 (MXU); bias add + ReLU on the f32 accumulator.
    # fc3 stays f32 (tiny, tighter parity with the f32 PyTorch reference).
    x = x_ref[...].astype(jnp.bfloat16)               # in-kernel cast (review #2)
    h1 = jnp.dot(x, w1_ref[...], preferred_element_type=jnp.float32)
    h1 = jnp.maximum(h1 + b1_ref[...], 0.0)           # f32 (TM, 128)
    h2 = jnp.dot(h1.astype(jnp.bfloat16), w2_ref[...],
                 preferred_element_type=jnp.float32)
    h2 = jnp.maximum(h2 + b2_ref[...], 0.0)           # f32 (TM, 128)
    out = jnp.dot(h2, w3_ref[...],
                  preferred_element_type=jnp.float32) + b3_ref[...]
    o_ref[...] = out.astype(o_ref.dtype)              # lane-dense full-width store


# --------------------------------------------------------------------------- #
# One-time parameter preparation (hoisted out of the per-call wrapper)
# --------------------------------------------------------------------------- #
def prepare_params(params):
    """Convert raw PyTorch-layout params once:
      - transpose W to (in_features, out_features),
      - cast fc1/fc2 weights to bf16 (MXU-native),
      - zero-pad fc3 columns to a multiple of 128 (lane-dense output store),
      - reshape biases to (1, out_features) f32.
    Returns (w1, b1, w2, b2, w3, b3, out_dim)."""
    w1, b1, w2, b2, w3, b3 = params          # PyTorch layout: W (out,in), b (out,)
    hidden = w1.shape[0]
    out_dim = w3.shape[0]
    out_pad = _round_up(out_dim, LANE)
    w1t = jnp.asarray(w1).T.astype(jnp.bfloat16)                     # (in, 128)
    w2t = jnp.asarray(w2).T.astype(jnp.bfloat16)                     # (128, 128)
    w3t = jnp.zeros((hidden, out_pad), jnp.float32).at[:, :out_dim].set(
        jnp.asarray(w3, jnp.float32).T)                              # (128, out_pad)
    b1r = jnp.asarray(b1, jnp.float32).reshape(1, hidden)
    b2r = jnp.asarray(b2, jnp.float32).reshape(1, hidden)
    b3r = jnp.zeros((1, out_pad), jnp.float32).at[:, :out_dim].set(
        jnp.asarray(b3, jnp.float32).reshape(1, out_dim))
    return (w1t, b1r, w2t, b2r, w3t, b3r, out_dim)


# --------------------------------------------------------------------------- #
# Tiling selection
# --------------------------------------------------------------------------- #
def _choose_tiling(B, input_dim, out_pad, out_bytes, weight_bytes):
    """Pick (TM, Bp, n_steps).
    Bp ~= B (pad only to a multiple of 16). For B >= 32 force an even step
    count >= 2 so dimension_semantics=('parallel',) shards across both v7x
    TensorCores. TM is capped so double-buffered x/out tiles plus resident
    weights fit comfortably under v7x's 64 MiB VMEM (tightest generation)."""
    Bp = _round_up(B, ROW_ALIGN)
    if Bp < 32:
        return Bp, Bp, 1                      # tiny inference batch: 1 step
    per_row = 2 * input_dim * 4 + 2 * out_pad * out_bytes   # x + out, 2 buffers
    budget = max((28 << 20) - 2 * weight_bytes, ROW_ALIGN * per_row)
    tm_cap = max(ROW_ALIGN, min(4096, (budget // per_row) // ROW_ALIGN * ROW_ALIGN))
    n_steps = max(2, pl.cdiv(Bp, tm_cap))
    if n_steps % 2:
        n_steps += 1                          # even #steps -> v7x 2-TC sharding
    TM = _round_up(pl.cdiv(Bp, n_steps), ROW_ALIGN)
    Bp = TM * n_steps
    return TM, Bp, n_steps


# --------------------------------------------------------------------------- #
# Forward wrapper
# --------------------------------------------------------------------------- #
def dqn_forward(x, prepped, *, slice_output=True, out_dtype=jnp.float32):
    """Pallas forward pass of DQNetwork.

    x:        (B, input_dim) float32 (cast to bf16 inside the kernel).
    prepped:  output of prepare_params().
    slice_output=False returns the padded (Bp, out_pad) array, skipping the
      extra HBM pass of the slice; rows >= B / columns >= out_dim are garbage.
    out_dtype=jnp.bfloat16 halves the dominant output writeback stream (v5e).
    """
    w1, b1, w2, b2, w3, b3, out_dim = prepped
    B, input_dim = x.shape
    hidden = w1.shape[1]
    out_pad = w3.shape[1]
    out_bytes = jnp.dtype(out_dtype).itemsize

    weight_bytes = int(
        w1.size * w1.dtype.itemsize + w2.size * w2.dtype.itemsize
        + w3.size * w3.dtype.itemsize
        + (b1.size + b2.size + b3.size) * 4)

    TM, Bp, n_steps = _choose_tiling(B, input_dim, out_pad, out_bytes, weight_bytes)
    xp = x if Bp == B else jnp.pad(x, ((0, Bp - B), (0, 0)))

    # Explicit scoped-VMEM limit sized from the chosen tile (+ headroom),
    # never above v7x's 64 MiB physical VMEM.
    io_vmem = 2 * TM * input_dim * 4 + 2 * TM * out_pad * out_bytes
    vmem_limit = int(min(io_vmem + 2 * weight_bytes + (4 << 20), 64 << 20))

    flops = 2 * Bp * (input_dim * hidden + hidden * hidden + hidden * out_pad)
    bytes_accessed = int(xp.size * xp.dtype.itemsize
                         + weight_bytes
                         + Bp * out_pad * out_bytes)

    def run(weight_buffers):
        # Grid-invariant operands: constant index_map; optionally single-buffered
        # (a second pipeline buffer is pure VMEM waste since they never re-DMA).
        if weight_buffers is None:
            def const(shape):
                return pl.BlockSpec(shape, lambda i: (0, 0))
        else:
            def const(shape):
                return pl.BlockSpec(shape, lambda i: (0, 0),
                                    pipeline_mode=pl.Buffered(weight_buffers))
        return pl.pallas_call(
            dqn_mlp_kernel,
            out_shape=jax.ShapeDtypeStruct((Bp, out_pad), out_dtype),
            grid=(n_steps,),
            in_specs=[
                pl.BlockSpec((TM, input_dim), lambda i: (i, 0)),  # x: tiled batch
                const((input_dim, hidden)),                       # W1 (bf16)
                const((1, hidden)),                               # b1
                const((hidden, hidden)),                          # W2 (bf16)
                const((1, hidden)),                               # b2
                const((hidden, out_pad)),                         # W3 (f32, padded)
                const((1, out_pad)),                              # b3 (padded)
            ],
            out_specs=pl.BlockSpec((TM, out_pad), lambda i: (i, 0)),
            compiler_params=pltpu.CompilerParams(
                dimension_semantics=("parallel",),  # v7x: shard batch over 2 TCs
                vmem_limit_bytes=vmem_limit),
            cost_estimate=pl.CostEstimate(
                flops=flops, bytes_accessed=bytes_accessed, transcendentals=0),
        )(xp, w1, b1, w2, b2, w3, b3)

    try:
        out = run(1)        # single-buffer the VMEM-resident weights
    except Exception:       # jax without Buffered(1) support in the TPU pipeliner
        out = run(None)     # default double-buffering: correct, just more VMEM

    if not slice_output:
        return out          # (Bp, out_pad); caller must ignore padded rows/cols
    return out[:B, :out_dim]


# --------------------------------------------------------------------------- #
# Reference / init (PyTorch nn.Linear layout and default init)
# --------------------------------------------------------------------------- #
def init_params(key, input_dim, output_dim):
    """PyTorch-layout params: W (out_features, in_features), b (out_features,);
    default nn.Linear init U(-1/sqrt(fan_in), 1/sqrt(fan_in))."""
    dims = [(HIDDEN, input_dim), (HIDDEN, HIDDEN), (output_dim, HIDDEN)]
    params = []
    for (fan_out, fan_in) in dims:
        key, kw, kb = jax.random.split(key, 3)
        bound = 1.0 / math.sqrt(fan_in)
        w = jax.random.uniform(kw, (fan_out, fan_in), jnp.float32, -bound, bound)
        b = jax.random.uniform(kb, (fan_out,), jnp.float32, -bound, bound)
        params += [w, b]
    return tuple(params)


def reference_forward(x, params):
    w1, b1, w2, b2, w3, b3 = params
    h1 = jnp.maximum(x @ w1.T + b1, 0.0)
    h2 = jnp.maximum(h1 @ w2.T + b2, 0.0)
    return h2 @ w3.T + b3


if __name__ == "__main__":
    key = jax.random.PRNGKey(0)
    key, kx, kx2 = jax.random.split(key, 3)

    batch, input_dim, output_dim = 8, 32, 8
    raw_params = init_params(key, input_dim, output_dim)
    prepped = prepare_params(raw_params)      # one-time weight prep (no per-call cost)

    # Small inference-style batch (single grid step).
    x = jax.random.normal(kx, (batch, input_dim), jnp.float32)
    out = jax.block_until_ready(dqn_forward(x, prepped))
    ref = reference_forward(x, raw_params)
    assert out.shape == (batch, output_dim)
    # bf16 fc1/fc2 operands vs f32 reference -> widened tolerance.
    assert jnp.allclose(out, ref, atol=5e-2, rtol=5e-2)

    # Training-style ragged batch: B=300 pads only to 304 and runs an even
    # 2-step parallel grid (both v7x TensorCores engaged).
    big_batch = 300
    xb = jax.random.normal(kx2, (big_batch, input_dim), jnp.float32)
    outb = jax.block_until_ready(dqn_forward(xb, prepped))
    refb = reference_forward(xb, raw_params)
    assert outb.shape == (big_batch, output_dim)
    assert jnp.allclose(outb, refb, atol=5e-2, rtol=5e-2)

    # Padded-output path: skips the post-kernel slice (extra HBM pass);
    # downstream must ignore rows >= B and columns >= out_dim.
    outp = jax.block_until_ready(dqn_forward(xb, prepped, slice_output=False))
    assert outp.shape[0] >= big_batch and outp.shape[1] % LANE == 0
    assert jnp.allclose(outp[:big_batch, :output_dim], refb, atol=5e-2, rtol=5e-2)

    print("KERNEL_OK")
</pallas_src>

<mosaic_0001>
module attributes {stable_mosaic.version = 11 : i64} {
  func.func @dqn_mlp_kernel(%arg0: i32, %arg1: memref<16x32xf32, #tpu.memory_space<vmem>>, %arg2: memref<32x128xbf16, #tpu.memory_space<vmem>>, %arg3: memref<1x128xf32, #tpu.memory_space<vmem>>, %arg4: memref<128x128xbf16, #tpu.memory_space<vmem>>, %arg5: memref<1x128xf32, #tpu.memory_space<vmem>>, %arg6: memref<128x128xf32, #tpu.memory_space<vmem>>, %arg7: memref<1x128xf32, #tpu.memory_space<vmem>>, %arg8: memref<16x128xf32, #tpu.memory_space<vmem>>) attributes {dimension_semantics = [#tpu.dimension_semantics<parallel>], iteration_bounds = array<i64: 1>, scalar_prefetch = 0 : i64, scratch_operands = 0 : i64, tpu.core_type = #tpu.core_type<tc>, window_params = [{transform_indices = @transform_0, window_bounds = array<i64: 16, 32>}, {pipeline_mode = #tpu.pipeline_mode<synchronous>, transform_indices = @transform_1, window_bounds = array<i64: 32, 128>}, {pipeline_mode = #tpu.pipeline_mode<synchronous>, transform_indices = @transform_2, window_bounds = array<i64: 1, 128>}, {pipeline_mode = #tpu.pipeline_mode<synchronous>, transform_indices = @transform_3, window_bounds = array<i64: 128, 128>}, {pipeline_mode = #tpu.pipeline_mode<synchronous>, transform_indices = @transform_4, window_bounds = array<i64: 1, 128>}, {pipeline_mode = #tpu.pipeline_mode<synchronous>, transform_indices = @transform_5, window_bounds = array<i64: 128, 128>}, {pipeline_mode = #tpu.pipeline_mode<synchronous>, transform_indices = @transform_6, window_bounds = array<i64: 1, 128>}, {transform_indices = @transform_7, window_bounds = array<i64: 16, 128>}]} {
    %c0 = arith.constant 0 : index
    %c0_0 = arith.constant 0 : index
    %0 = vector.load %arg1[%c0, %c0_0] : memref<16x32xf32, #tpu.memory_space<vmem>>, vector<16x32xf32>
    %1 = arith.truncf %0 : vector<16x32xf32> to vector<16x32xbf16>
    %c0_1 = arith.constant 0 : index
    %c0_2 = arith.constant 0 : index
    %2 = vector.load %arg2[%c0_1, %c0_2] : memref<32x128xbf16, #tpu.memory_space<vmem>>, vector<32x128xbf16>
    %cst = arith.constant dense<0.000000e+00> : vector<16x128xf32>
    %3 = tpu.matmul %1, %2, %cst {dimension_numbers = #tpu.dot_dimension_numbers<[1], [0], [0], [1], [0, 0, 1, 1], [], []>} : vector<16x32xbf16>, vector<32x128xbf16>, vector<16x128xf32> -> vector<16x128xf32>
    %c0_3 = arith.constant 0 : index
    %c0_4 = arith.constant 0 : index
    %4 = vector.load %arg3[%c0_3, %c0_4] : memref<1x128xf32, #tpu.memory_space<vmem>>, vector<1x128xf32>
    %5 = vector.broadcast %4 : vector<1x128xf32> to vector<16x128xf32>
    %6 = arith.addf %3, %5 : vector<16x128xf32>
    %cst_5 = arith.constant 0.000000e+00 : f32
    %7 = vector.broadcast %cst_5 : f32 to vector<16x128xf32>
    %8 = arith.maximumf %6, %7 : vector<16x128xf32>
    %9 = arith.truncf %8 : vector<16x128xf32> to vector<16x128xbf16>
    %c0_6 = arith.constant 0 : index
    %c0_7 = arith.constant 0 : index
    %10 = vector.load %arg4[%c0_6, %c0_7] : memref<128x128xbf16, #tpu.memory_space<vmem>>, vector<128x128xbf16>
    %cst_8 = arith.constant dense<0.000000e+00> : vector<16x128xf32>
    %11 = tpu.matmul %9, %10, %cst_8 {dimension_numbers = #tpu.dot_dimension_numbers<[1], [0], [0], [1], [0, 0, 1, 1], [], []>} : vector<16x128xbf16>, vector<128x128xbf16>, vector<16x128xf32> -> vector<16x128xf32>
    %c0_9 = arith.constant 0 : index
    %c0_10 = arith.constant 0 : index
    %12 = vector.load %arg5[%c0_9, %c0_10] : memref<1x128xf32, #tpu.memory_space<vmem>>, vector<1x128xf32>
    %13 = vector.broadcast %12 : vector<1x128xf32> to vector<16x128xf32>
    %14 = arith.addf %11, %13 : vector<16x128xf32>
    %cst_11 = arith.constant 0.000000e+00 : f32
    %15 = vector.broadcast %cst_11 : f32 to vector<16x128xf32>
    %16 = arith.maximumf %14, %15 : vector<16x128xf32>
    %c0_12 = arith.constant 0 : index
    %c0_13 = arith.constant 0 : index
    %17 = vector.load %arg6[%c0_12, %c0_13] : memref<128x128xf32, #tpu.memory_space<vmem>>, vector<128x128xf32>
    %cst_14 = arith.constant dense<0.000000e+00> : vector<16x128xf32>
    %18 = tpu.matmul %16, %17, %cst_14 {dimension_numbers = #tpu.dot_dimension_numbers<[1], [0], [0], [1], [0, 0, 1, 1], [], []>} : vector<16x128xf32>, vector<128x128xf32>, vector<16x128xf32> -> vector<16x128xf32>
    %c0_15 = arith.constant 0 : index
    %c0_16 = arith.constant 0 : index
    %19 = vector.load %arg7[%c0_15, %c0_16] : memref<1x128xf32, #tpu.memory_space<vmem>>, vector<1x128xf32>
    %20 = vector.broadcast %19 : vector<1x128xf32> to vector<16x128xf32>
    %21 = arith.addf %18, %20 : vector<16x128xf32>
    %c0_17 = arith.constant 0 : index
    %c0_18 = arith.constant 0 : index
    %22 = vector.load %arg8[%c0_17, %c0_18] : memref<16x128xf32, #tpu.memory_space<vmem>>, vector<16x128xf32>
    tpu.vector_store %arg8[%c0_17, %c0_18], %21 {strides = array<i32>} : memref<16x128xf32, #tpu.memory_space<vmem>>, vector<16x128xf32>,
    return
  }
  func.func @transform_0(%arg0: i32) -> (i32, i32) {
    %c0_i32 = arith.constant 0 : i32
    %c0_i32_0 = arith.constant 0 : i32
    return %arg0, %c0_i32 : i32, i32
  }
  func.func @transform_1(%arg0: i32) -> (i32, i32) {
    %c0_i32 = arith.constant 0 : i32
    %c0_i32_0 = arith.constant 0 : i32
    %c0_i32_1 = arith.constant 0 : i32
    return %c0_i32, %c0_i32_0 : i32, i32
  }
  func.func @transform_2(%arg0: i32) -> (i32, i32) {
    %c0_i32 = arith.constant 0 : i32
    %c0_i32_0 = arith.constant 0 : i32
    %c0_i32_1 = arith.constant 0 : i32
    return %c0_i32, %c0_i32_0 : i32, i32
  }
  func.func @transform_3(%arg0: i32) -> (i32, i32) {
    %c0_i32 = arith.constant 0 : i32
    %c0_i32_0 = arith.constant 0 : i32
    %c0_i32_1 = arith.constant 0 : i32
    return %c0_i32, %c0_i32_0 : i32, i32
  }
  func.func @transform_4(%arg0: i32) -> (i32, i32) {
    %c0_i32 = arith.constant 0 : i32
    %c0_i32_0 = arith.constant 0 : i32
    %c0_i32_1 = arith.constant 0 : i32
    return %c0_i32, %c0_i32_0 : i32, i32
  }
  func.func @transform_5(%arg0: i32) -> (i32, i32) {
    %c0_i32 = arith.constant 0 : i32
    %c0_i32_0 = arith.constant 0 : i32
    %c0_i32_1 = arith.constant 0 : i32
    return %c0_i32, %c0_i32_0 : i32, i32
  }
  func.func @transform_6(%arg0: i32) -> (i32, i32) {
    %c0_i32 = arith.constant 0 : i32
    %c0_i32_0 = arith.constant 0 : i32
    %c0_i32_1 = arith.constant 0 : i32
    return %c0_i32, %c0_i32_0 : i32, i32
  }
  func.func @transform_7(%arg0: i32) -> (i32, i32) {
    %c0_i32 = arith.constant 0 : i32
    %c0_i32_0 = arith.constant 0 : i32
    return %arg0, %c0_i32 : i32, i32
  }
}

module attributes {stable_mosaic.version = 11 : i64} {
  func.func @dqn_mlp_kernel(%arg0: i32, %arg1: memref<16x32xf32, #tpu.memory_space<vmem>>, %arg2: memref<32x128xbf16, #tpu.memory_space<vmem>>, %arg3: memref<1x128xf32, #tpu.memory_space<vmem>>, %arg4: memref<128x128xbf16, #tpu.memory_space<vmem>>, %arg5: memref<1x128xf32, #tpu.memory_space<vmem>>, %arg6: memref<128x128xf32, #tpu.memory_space<vmem>>, %arg7: memref<1x128xf32, #tpu.memory_space<vmem>>, %arg8: memref<16x128xf32, #tpu.memory_space<vmem>>) attributes {dimension_semantics = [#tpu.dimension_semantics<parallel>], iteration_bounds = array<i64: 1>, scalar_prefetch = 0 : i64, scratch_operands = 0 : i64, tpu.core_type = #tpu.core_type<tc>, window_params = [{transform_indices = @transform_0, window_bounds = array<i64: 16, 32>}, {pipeline_mode = #tpu.pipeline_mode<synchronous>, transform_indices = @transform_1, window_bounds = array<i64: 32, 128>}, {pipeline_mode = #tpu.pipeline_mode<synchronous>, transform_indices = @transform_2, window_bounds = array<i64: 1, 128>}, {pipeline_mode = #tpu.pipeline_mode<synchronous>, transform_indices = @transform_3, window_bounds = array<i64: 128, 128>}, {pipeline_mode = #tpu.pipeline_mode<synchronous>, transform_indices = @transform_4, window_bounds = array<i64: 1, 128>}, {pipeline_mode = #tpu.pipeline_mode<synchronous>, transform_indices = @transform_5, window_bounds = array<i64: 128, 128>}, {pipeline_mode = #tpu.pipeline_mode<synchronous>, transform_indices = @transform_6, window_bounds = array<i64: 1, 128>}, {transform_indices = @transform_7, window_bounds = array<i64: 16, 128>}]} {
    %c0 = arith.constant 0 : index
    %c0_0 = arith.constant 0 : index
    %0 = vector.load %arg1[%c0, %c0_0] : memref<16x32xf32, #tpu.memory_space<vmem>>, vector<16x32xf32>
    %1 = arith.truncf %0 : vector<16x32xf32> to vector<16x32xbf16>
    %c0_1 = arith.constant 0 : index
    %c0_2 = arith.constant 0 : index
    %2 = vector.load %arg2[%c0_1, %c0_2] : memref<32x128xbf16, #tpu.memory_space<vmem>>, vector<32x128xbf16>
    %cst = arith.constant dense<0.000000e+00> : vector<16x128xf32>
    %3 = tpu.matmul %1, %2, %cst {dimension_numbers = #tpu.dot_dimension_numbers<[1], [0], [0], [1], [0, 0, 1, 1], [], []>} : vector<16x32xbf16>, vector<32x128xbf16>, vector<16x128xf32> -> vector<16x128xf32>
    %c0_3 = arith.constant 0 : index
    %c0_4 = arith.constant 0 : index
    %4 = vector.load %arg3[%c0_3, %c0_4] : memref<1x128xf32, #tpu.memory_space<vmem>>, vector<1x128xf32>
    %5 = vector.broadcast %4 : vector<1x128xf32> to vector<16x128xf32>
    %6 = arith.addf %3, %5 : vector<16x128xf32>
    %cst_5 = arith.constant 0.000000e+00 : f32
    %7 = vector.broadcast %cst_5 : f32 to vector<16x128xf32>
    %8 = arith.maximumf %6, %7 : vector<16x128xf32>
    %9 = arith.truncf %8 : vector<16x128xf32> to vector<16x128xbf16>
    %c0_6 = arith.constant 0 : index
    %c0_7 = arith.constant 0 : index
    %10 = vector.load %arg4[%c0_6, %c0_7] : memref<128x128xbf16, #tpu.memory_space<vmem>>, vector<128x128xbf16>
    %cst_8 = arith.constant dense<0.000000e+00> : vector<16x128xf32>
    %11 = tpu.matmul %9, %10, %cst_8 {dimension_numbers = #tpu.dot_dimension_numbers<[1], [0], [0], [1], [0, 0, 1, 1], [], []>} : vector<16x128xbf16>, vector<128x128xbf16>, vector<16x128xf32> -> vector<16x128xf32>
    %c0_9 = arith.constant 0 : index
    %c0_10 = arith.constant 0 : index
    %12 = vector.load %arg5[%c0_9, %c0_10] : memref<1x128xf32, #tpu.memory_space<vmem>>, vector<1x128xf32>
    %13 = vector.broadcast %12 : vector<1x128xf32> to vector<16x128xf32>
    %14 = arith.addf %11, %13 : vector<16x128xf32>
    %cst_11 = arith.constant 0.000000e+00 : f32
    %15 = vector.broadcast %cst_11 : f32 to vector<16x128xf32>
    %16 = arith.maximumf %14, %15 : vector<16x128xf32>
    %c0_12 = arith.constant 0 : index
    %c0_13 = arith.constant 0 : index
    %17 = vector.load %arg6[%c0_12, %c0_13] : memref<128x128xf32, #tpu.memory_space<vmem>>, vector<128x128xf32>
    %cst_14 = arith.constant dense<0.000000e+00> : vector<16x128xf32>
    %18 = tpu.matmul %16, %17, %cst_14 {dimension_numbers = #tpu.dot_dimension_numbers<[1], [0], [0], [1], [0, 0, 1, 1], [], []>} : vector<16x128xf32>, vector<128x128xf32>, vector<16x128xf32> -> vector<16x128xf32>
    %c0_15 = arith.constant 0 : index
    %c0_16 = arith.constant 0 : index
    %19 = vector.load %arg7[%c0_15, %c0_16] : memref<1x128xf32, #tpu.memory_space<vmem>>, vector<1x128xf32>
    %20 = vector.broadcast %19 : vector<1x128xf32> to vector<16x128xf32>
    %21 = arith.addf %18, %20 : vector<16x128xf32>
    %c0_17 = arith.constant 0 : index
    %c0_18 = arith.constant 0 : index
    %22 = vector.load %arg8[%c0_17, %c0_18] : memref<16x128xf32, #tpu.memory_space<vmem>>, vector<16x128xf32>
    tpu.vector_store %arg8[%c0_17, %c0_18], %21 {strides = array<i32>} : memref<16x128xf32, #tpu.memory_space<vmem>>, vector<16x128xf32>,
    return
  }
  func.func @transform_0(%arg0: i32) -> (i32, i32) {
    %c0_i32 = arith.constant 0 : i32
    %c0_i32_0 = arith.constant 0 : i32
    return %arg0, %c0_i32 : i32, i32
  }
  func.func @transform_1(%arg0: i32) -> (i32, i32) {
    %c0_i32 = arith.constant 0 : i32
    %c0_i32_0 = arith.constant 0 : i32
    %c0_i32_1 = arith.constant 0 : i32
    return %c0_i32, %c0_i32_0 : i32, i32
  }
  func.func @transform_2(%arg0: i32) -> (i32, i32) {
    %c0_i32 = arith.constant 0 : i32
    %c0_i32_0 = arith.constant 0 : i32
    %c0_i32_1 = arith.constant 0 : i32
    return %c0_i32, %c0_i32_0 : i32, i32
  }
  func.func @transform_3(%arg0: i32) -> (i32, i32) {
    %c0_i32 = arith.constant 0 : i32
    %c0_i32_0 = arith.constant 0 : i32
    %c0_i32_1 = arith.constant 0 : i32
    return %c0_i32, %c0_i32_0 : i32, i32
  }
  func.func @transform_4(%arg0: i32) -> (i32, i32) {
    %c0_i32 = arith.constant 0 : i32
    %c0_i32_0 = arith.constant 0 : i32
    %c0_i32_1 = arith.constant 0 : i32
    return %c0_i32, %c0_i32_0 : i32, i32
  }
  func.func @transform_5(%arg0: i32) -> (i32, i32) {
    %c0_i32 = arith.constant 0 : i32
    %c0_i32_0 = arith.constant 0 : i32
    %c0_i32_1 = arith.constant 0 : i32
    return %c0_i32, %c0_i32_0 : i32, i32
  }
  func.func @transform_6(%arg0: i32) -> (i32, i32) {
    %c0_i32 = arith.constant 0 : i32
    %c0_i32_0 = arith.constant 0 : i32
    %c0_i32_1 = arith.constant 0 : i32
    return %c0_i32, %c0_i32_0 : i32, i32
  }
  func.func @transform_7(%arg0: i32) -> (i32, i32) {
    %c0_i32 = arith.constant 0 : i32
    %c0_i32_0 = arith.constant 0 : i32
    return %arg0, %c0_i32 : i32, i32
  }
}

</mosaic_0001>

<llo_original>
// kernel: tpu_custom_call.1
$region0: #{tpu_custom_call.1}
  #allocation0 [shape = 'u32[]', space=smem, size = 0x4, offset = 0x4, fixed_abs, tag = 'smem constant byte address 0x4 - core index']
  #allocation1 [shape = 'u32[144,128]{1,0:T(1,128)}', space=vmem, size = 0x12000, scoped, tag = 'internal scratch']
  %s0 = inlined_call_operand.hbm [shape: f32[16,32], index: 0, kind: input, shape index: {}]
  %s1 = inlined_call_operand.hbm [shape: bf16[32,128], index: 1, kind: input, shape index: {}]
  %s2 = inlined_call_operand.vmem [shape: f32[1,128], index: 2, kind: input, shape index: {}]
  %s3 = inlined_call_operand.hbm [shape: bf16[128,128], index: 3, kind: input, shape index: {}]
  %s4 = inlined_call_operand.vmem [shape: f32[1,128], index: 4, kind: input, shape index: {}]
  %s5 = inlined_call_operand.hbm [shape: f32[128,128], index: 5, kind: input, shape index: {}]
  %s6 = inlined_call_operand.vmem [shape: f32[1,128], index: 6, kind: input, shape index: {}]
  %s7 = inlined_call_operand.hbm [shape: f32[16,128], index: 7, kind: output, shape index: {}]
  %s8 = sld [smem:[#allocation0]]
  $region54: #{tpu_custom_call.1} parent=0
    _
  %s10 = ssub.s32 1, %s8
  %s11 = scalar_select 0, %s10, %s8
  $region1: #{tpu_custom_call.1} parent=0
    #allocation2 [shape = 'u8[8192]{0}', space=vmem, size = 0x2000, scoped, tag = 'input window, operand 0, single buffered']
    #allocation3 [shape = 's32[1]{0}', space=sflag, size = 0x4, scoped, tag = 'scoped memory for tpu_custom_call.1']
    #allocation4 [shape = 's32[1]{0}', space=sflag, size = 0x4, scoped, tag = 'scoped memory for tpu_custom_call.1']
    #allocation5 [shape = 'u8[8192]{0}', space=vmem, size = 0x2000, scoped, tag = 'input window, operand 1, single buffered']
    #allocation6 [shape = 's32[1]{0}', space=sflag, size = 0x4, scoped, tag = 'scoped memory for tpu_custom_call.1']
    #allocation7 [shape = 'u8[32768]{0}', space=vmem, size = 0x8000, scoped, tag = 'input window, operand 3, single buffered']
    #allocation8 [shape = 'u8[65536]{0}', space=vmem, size = 0x10000, scoped, tag = 'input window, operand 5, single buffered']
    #allocation9 [shape = 's32[1]{0}', space=sflag, size = 0x4, scoped, tag = 'scoped memory for tpu_custom_call.1']
    #allocation10 [shape = 'u8[8192]{0}', space=vmem, size = 0x2000, scoped, tag = 'output window, operand 0, single buffered']
    %12 = vsyncpa [#allocation3], 0
    %13 = vsyncpa [#allocation6], 0
    %14 = vsyncpa [#allocation9], 0
    %15 = vsyncpa [#allocation4], 0
    // Predicated region
    $region2: #{tpu_custom_call.1} parent=1 // pred_check
      _
    $region3: #{tpu_custom_call.1} parent=1 // pred_check_branch
      %17 = sbr.rel (0) target = $region5
    $region4: #{tpu_custom_call.1} parent=1 // pred_region
      %s19 = ssub.s32 256, 256
      %20 = vsyncadd [#allocation3], %s19
      %s21 = sshll.u32 [#allocation2], 4
      %s22 = int_to_ptr.vmem [resolvable:$true] %s21
      %27 = dma.hbm_to_vmem [thread:$0]  %s0, 256, %s22, [#allocation3], 128, 128, 8
    $region5: #{tpu_custom_call.1} parent=1 // pred_fallthru
      _
    // Predicated region
    $region6: #{tpu_custom_call.1} parent=1 // pred_check
      _
    $region7: #{tpu_custom_call.1} parent=1 // pred_check_branch
      %29 = sbr.rel (0) target = $region9
    $region8: #{tpu_custom_call.1} parent=1 // pred_region
      %s31 = ssub.s32 256, 256
      %32 = vsyncadd [#allocation6], %s31
      %s33 = sshll.u32 [#allocation5], 4
      %s34 = int_to_ptr.vmem [resolvable:$true] %s33
      %39 = dma.hbm_to_vmem [thread:$0]  %s1, 256, %s34, [#allocation6], 64, 64, 4
    $region9: #{tpu_custom_call.1} parent=1 // pred_fallthru
      _
    // Predicated region
    $region10: #{tpu_custom_call.1} parent=1 // pred_check
      _
    $region11: #{tpu_custom_call.1} parent=1 // pred_check_branch
      %41 = sbr.rel (0) target = $region13
    $region12: #{tpu_custom_call.1} parent=1 // pred_region
      _
    $region13: #{tpu_custom_call.1} parent=1 // pred_fallthru
      _
    // Predicated region
    $region14: #{tpu_custom_call.1} parent=1 // pred_check
      _
    $region15: #{tpu_custom_call.1} parent=1 // pred_check_branch
      %43 = sbr.rel (0) target = $region17
    $region16: #{tpu_custom_call.1} parent=1 // pred_region
      %s45 = ssub.s32 1024, 1024
      %46 = vsyncadd [#allocation6], %s45
      %s47 = sshll.u32 [#allocation7], 4
      %s48 = int_to_ptr.vmem [resolvable:$true] %s47
      %53 = dma.hbm_to_vmem [thread:$0]  %s3, 1024, %s48, [#allocation6], 64, 64, 4
    $region17: #{tpu_custom_call.1} parent=1 // pred_fallthru
      _
    // Predicated region
    $region18: #{tpu_custom_call.1} parent=1 // pred_check
      _
    $region19: #{tpu_custom_call.1} parent=1 // pred_check_branch
      %55 = sbr.rel (0) target = $region21
    $region20: #{tpu_custom_call.1} parent=1 // pred_region
      _
    $region21: #{tpu_custom_call.1} parent=1 // pred_fallthru
      _
    // Predicated region
    $region22: #{tpu_custom_call.1} parent=1 // pred_check
      _
    $region23: #{tpu_custom_call.1} parent=1 // pred_check_branch
      %57 = sbr.rel (0) target = $region25
    $region24: #{tpu_custom_call.1} parent=1 // pred_region
      %s59 = ssub.s32 2048, 2048
      %60 = vsyncadd [#allocation9], %s59
      %s61 = sshll.u32 [#allocation8], 4
      %s62 = int_to_ptr.vmem [resolvable:$true] %s61
      %67 = dma.hbm_to_vmem [thread:$0]  %s5, 2048, %s62, [#allocation9], 128, 128, 8
    $region25: #{tpu_custom_call.1} parent=1 // pred_fallthru
      _
    // Predicated region
    $region26: #{tpu_custom_call.1} parent=1 // pred_check
      _
    $region27: #{tpu_custom_call.1} parent=1 // pred_check_branch
      %69 = sbr.rel (0) target = $region29
    $region28: #{tpu_custom_call.1} parent=1 // pred_region
      _
    $region29: #{tpu_custom_call.1} parent=1 // pred_fallthru
      _
    // Predicated region
    $region30: #{tpu_custom_call.1} parent=1 // pred_check
      _
    $region31: #{tpu_custom_call.1} parent=1 // pred_check_branch
      %71 = sbr.rel (0) target = $region33
    $region32: #{tpu_custom_call.1} parent=1 // pred_region
      %72 = dma.done [#allocation3], 256
    $region33: #{tpu_custom_call.1} parent=1 // pred_fallthru
      _
    // Predicated region
    $region34: #{tpu_custom_call.1} parent=1 // pred_check
      _
    $region35: #{tpu_custom_call.1} parent=1 // pred_check_branch
      %74 = sbr.rel (0) target = $region37
    $region36: #{tpu_custom_call.1} parent=1 // pred_region
      %75 = dma.done [#allocation6], 256
    $region37: #{tpu_custom_call.1} parent=1 // pred_fallthru
      _
    // Predicated region
    $region38: #{tpu_custom_call.1} parent=1 // pred_check
      _
    $region39: #{tpu_custom_call.1} parent=1 // pred_check_branch
      %77 = sbr.rel (0) target = $region41
    $region40: #{tpu_custom_call.1} parent=1 // pred_region
      %78 = dma.done [#allocation6], 1024
    $region41: #{tpu_custom_call.1} parent=1 // pred_fallthru
      _
    // Predicated region
    $region42: #{tpu_custom_call.1} parent=1 // pred_check
      _
    $region43: #{tpu_custom_call.1} parent=1 // pred_check_branch
      %80 = sbr.rel (0) target = $region45
    $region44: #{tpu_custom_call.1} parent=1 // pred_region
      %81 = dma.done [#allocation9], 2048
    $region45: #{tpu_custom_call.1} parent=1 // pred_fallthru
      _
    %v83 = vld [vmem:[#allocation2] sm:$0xff]
    %v84 = vld [vmem:[#allocation2 + $0x8] sm:$0xff]
    %v85 = vpack.c.bf16 %v84, %v83
    %v86 = vld [vmem:[#allocation5] sm:$0xf]
    %v87 = vld [vmem:[#allocation5 + $0x4] sm:$0xf]
    %v88 = vld [vmem:[#allocation5 + $0x8] sm:$0xf]
    %v89 = vld [vmem:[#allocation5 + $0xc] sm:$0xf]
    %v90 = vld [vmem:[%s2] sm:$0x1]
    %v92 = vlaneseq
    %v93 = vshrl.u32 %v92, 7
    %v94 = vsub.s32 0, %v93
    %v95 = vrot.slane %v90, %v94
    %v101 = vunpack.c.l.b16 %v86
    %v102 = vunpack.c.l.b16 %v87
    %v103 = vunpack.c.l.b16 %v88
    %v104 = vunpack.c.l.b16 %v89
    %v105 = vpack.c.b16 %v102, %v101
    %v106 = vpack.c.b16 %v104, %v103
    %vm109 = vcmask 261120
    %v111 = vsel %vm109, %v85, 0
    %113 = vmatprep.subr.bf16.mxu0 0
    %114 = vmatpush1.bf16.msra.mxu0 0
    %115 = vmatprep.subr.bf16.mxu0 0
    %116 = vmatpush1.bf16.msra.mxu0 0
    %117 = vmatprep.subr.bf16.mxu0 0
    %118 = vmatpush1.bf16.msra.mxu0 0
    %119 = vmatprep.subr.bf16.mxu0 0
    %120 = vmatpush1.bf16.msra.mxu0 0
    %121 = vmatprep.subr.bf16.mxu0 0
    %122 = vmatpush1.bf16.msra.mxu0 0
    %123 = vmatprep.subr.bf16.mxu0 0
    %124 = vmatpush1.bf16.msra.mxu0 0
    %125 = vmatprep.subr.bf16.mxu0 0
    %126 = vmatpush1.bf16.msra.mxu0 %v106
    %127 = vmatprep.subr.bf16.mxu0 0
    %128 = vmatpush1.bf16.msra.mxu0 %v105
    %129 = vmatprep.subr.bf16.mxu0 0
    %130 = vmatpush2.bf16.msra.mxu0 0
    %131 = vmatprep.subr.bf16.mxu0 0
    %132 = vmatpush2.bf16.msra.mxu0 0
    %133 = vmatprep.subr.bf16.mxu0 0
    %134 = vmatpush2.bf16.msra.mxu0 0
    %135 = vmatprep.subr.bf16.mxu0 0
    %136 = vmatpush2.bf16.msra.mxu0 0
    %137 = vmatprep.subr.bf16.mxu0 0
    %138 = vmatpush2.bf16.msra.mxu0 0
    %139 = vmatprep.subr.bf16.mxu0 0
    %140 = vmatpush2.bf16.msra.mxu0 0
    %141 = vmatprep.subr.bf16.mxu0 0
    %142 = vmatpush2.bf16.msra.mxu0 0
    %143 = vmatprep.subr.bf16.mxu0 0
    %144 = vmatpush2.bf16.msra.mxu0 0
    %145 = vmatprep.mubr.bf16.mxu0 0
    %146 = vmatmul.mubr.bf16.gmra.mxu0 %v111
    %v147 = vpop.f32.mrf.mxu0
    %v148 = vadd.f32 %v95, %v147
    %v149 = vpop.f32.mrf.mxu0
    %v150 = vpop.f32.mrf.mxu0
    %v151 = vadd.f32 %v95, %v150
    %v152 = vpop.f32.mrf.mxu0
    %153 = vdwg.mxu0
    %v154 = vmax.f32 %v148, 0.0
    %v155 = vmax.f32 %v151, 0.0
    %v156 = vpack.c.bf16 %v155, %v154
    %v157 = vld [vmem:[#allocation7] sm:$0xf]
    %v158 = vld [vmem:[#allocation7 + $0x4] sm:$0xf]
    %v159 = vld [vmem:[#allocation7 + $0x8] sm:$0xf]
    %v160 = vld [vmem:[#allocation7 + $0xc] sm:$0xf]
    %v161 = vld [vmem:[#allocation7 + $0x10] sm:$0xf]
    %v162 = vld [vmem:[#allocation7 + $0x14] sm:$0xf]
    %v163 = vld [vmem:[#allocation7 + $0x18] sm:$0xf]
    %v164 = vld [vmem:[#allocation7 + $0x1c] sm:$0xf]
    %v165 = vld [vmem:[#allocation7 + $0x20] sm:$0xf]
    %v166 = vld [vmem:[#allocation7 + $0x24] sm:$0xf]
    %v167 = vld [vmem:[#allocation7 + $0x28] sm:$0xf]
    %v168 = vld [vmem:[#allocation7 + $0x2c] sm:$0xf]
    %v169 = vld [vmem:[#allocation7 + $0x30] sm:$0xf]
    %v170 = vld [vmem:[#allocation7 + $0x34] sm:$0xf]
    %v171 = vld [vmem:[#allocation7 + $0x38] sm:$0xf]
    %v172 = vld [vmem:[#allocation7 + $0x3c] sm:$0xf]
    %v173 = vld [vmem:[%s4] sm:$0x1]
    %v175 = vlaneseq
    %v176 = vshrl.u32 %v175, 7
    %v177 = vsub.s32 0, %v176
    %v178 = vrot.slane %v173, %v177
    %v196 = vunpack.c.l.b16 %v157
    %v197 = vunpack.c.l.b16 %v158
    %v198 = vunpack.c.l.b16 %v159
    %v199 = vunpack.c.l.b16 %v160
    %v200 = vunpack.c.l.b16 %v161
    %v201 = vunpack.c.l.b16 %v162
    %v202 = vunpack.c.l.b16 %v163
    %v203 = vunpack.c.l.b16 %v164
    %v204 = vunpack.c.l.b16 %v165
    %v205 = vunpack.c.l.b16 %v166
    %v206 = vunpack.c.l.b16 %v167
    %v207 = vunpack.c.l.b16 %v168
    %v208 = vunpack.c.l.b16 %v169
    %v209 = vunpack.c.l.b16 %v170
    %v210 = vunpack.c.l.b16 %v171
    %v211 = vunpack.c.l.b16 %v172
    %v212 = vpack.c.b16 %v197, %v196
    %v213 = vpack.c.b16 %v199, %v198
    %v214 = vpack.c.b16 %v201, %v200
    %v215 = vpack.c.b16 %v203, %v202
    %v216 = vpack.c.b16 %v205, %v204
    %v217 = vpack.c.b16 %v207, %v206
    %v218 = vpack.c.b16 %v209, %v208
    %v219 = vpack.c.b16 %v211, %v210
    %228 = vmatprep.subr.bf16.mxu0 0
    %229 = vmatpush1.bf16.msra.mxu0 %v219
    %230 = vmatprep.subr.bf16.mxu0 0
    %231 = vmatpush1.bf16.msra.mxu0 %v218
    %232 = vmatprep.subr.bf16.mxu0 0
    %233 = vmatpush1.bf16.msra.mxu0 %v217
    %234 = vmatprep.subr.bf16.mxu0 0
    %235 = vmatpush1.bf16.msra.mxu0 %v216
    %236 = vmatprep.subr.bf16.mxu0 0
    %237 = vmatpush1.bf16.msra.mxu0 %v215
    %238 = vmatprep.subr.bf16.mxu0 0
    %239 = vmatpush1.bf16.msra.mxu0 %v214
    %240 = vmatprep.subr.bf16.mxu0 0
    %241 = vmatpush1.bf16.msra.mxu0 %v213
    %242 = vmatprep.subr.bf16.mxu0 0
    %243 = vmatpush1.bf16.msra.mxu0 %v212
    %244 = vmatprep.subr.bf16.mxu0 0
    %245 = vmatpush2.bf16.msra.mxu0 0
    %246 = vmatprep.subr.bf16.mxu0 0
    %247 = vmatpush2.bf16.msra.mxu0 0
    %248 = vmatprep.subr.bf16.mxu0 0
    %249 = vmatpush2.bf16.msra.mxu0 0
    %250 = vmatprep.subr.bf16.mxu0 0
    %251 = vmatpush2.bf16.msra.mxu0 0
    %252 = vmatprep.subr.bf16.mxu0 0
    %253 = vmatpush2.bf16.msra.mxu0 0
    %254 = vmatprep.subr.bf16.mxu0 0
    %255 = vmatpush2.bf16.msra.mxu0 0
    %256 = vmatprep.subr.bf16.mxu0 0
    %257 = vmatpush2.bf16.msra.mxu0 0
    %258 = vmatprep.subr.bf16.mxu0 0
    %259 = vmatpush2.bf16.msra.mxu0 0
    %260 = vmatprep.mubr.bf16.mxu0 0
    %261 = vmatmul.mubr.bf16.gmra.mxu0 %v156
    %v262 = vpop.f32.mrf.mxu0
    %v263 = vadd.f32 %v178, %v262
    %v264 = vpop.f32.mrf.mxu0
    %v265 = vpop.f32.mrf.mxu0
    %v266 = vadd.f32 %v178, %v265
    %v267 = vpop.f32.mrf.mxu0
    %268 = vdwg.mxu0
    %v269 = vmax.f32 %v263, 0.0
    %v270 = vmax.f32 %v266, 0.0
    %v271 = vld [vmem:[#allocation8] sm:$0xff]
    %v272 = vld [vmem:[#allocation8 + $0x8] sm:$0xff]
    %v273 = vld [vmem:[#allocation8 + $0x10] sm:$0xff]
    %v274 = vld [vmem:[#allocation8 + $0x18] sm:$0xff]
    %v275 = vld [vmem:[#allocation8 + $0x20] sm:$0xff]
    %v276 = vld [vmem:[#allocation8 + $0x28] sm:$0xff]
    %v277 = vld [vmem:[#allocation8 + $0x30] sm:$0xff]
    %v278 = vld [vmem:[#allocation8 + $0x38] sm:$0xff]
    %v279 = vld [vmem:[#allocation8 + $0x40] sm:$0xff]
    %v280 = vld [vmem:[#allocation8 + $0x48] sm:$0xff]
    %v281 = vld [vmem:[#allocation8 + $0x50] sm:$0xff]
    %v282 = vld [vmem:[#allocation8 + $0x58] sm:$0xff]
    %v283 = vld [vmem:[#allocation8 + $0x60] sm:$0xff]
    %v284 = vld [vmem:[#allocation8 + $0x68] sm:$0xff]
    %v285 = vld [vmem:[#allocation8 + $0x70] sm:$0xff]
    %v286 = vld [vmem:[#allocation8 + $0x78] sm:$0xff]
    %v287 = vld [vmem:[%s6] sm:$0x1]
    %v289 = vlaneseq
    %v290 = vshrl.u32 %v289, 7
    %v291 = vsub.s32 0, %v290
    %v292 = vrot.slane %v287, %v291
    %294 = vmatprep.subr.mxu0 0.0
    %295 = vmatpush1.msra.mxu0 %v286
    %296 = vmatprep.subr.mxu0 0.0
    %297 = vmatpush1.msra.mxu0 %v285
    %298 = vmatprep.subr.mxu0 0.0
    %299 = vmatpush1.msra.mxu0 %v284
    %300 = vmatprep.subr.mxu0 0.0
    %301 = vmatpush1.msra.mxu0 %v283
    %302 = vmatprep.subr.mxu0 0.0
    %303 = vmatpush1.msra.mxu0 %v282
    %304 = vmatprep.subr.mxu0 0.0
    %305 = vmatpush1.msra.mxu0 %v281
    %306 = vmatprep.subr.mxu0 0.0
    %307 = vmatpush1.msra.mxu0 %v280
    %308 = vmatprep.subr.mxu0 0.0
    %309 = vmatpush1.msra.mxu0 %v279
    %310 = vmatprep.subr.mxu0 0.0
    %311 = vmatpush1.msra.mxu0 %v278
    %312 = vmatprep.subr.mxu0 0.0
    %313 = vmatpush1.msra.mxu0 %v277
    %314 = vmatprep.subr.mxu0 0.0
    %315 = vmatpush1.msra.mxu0 %v276
    %316 = vmatprep.subr.mxu0 0.0
    %317 = vmatpush1.msra.mxu0 %v275
    %318 = vmatprep.subr.mxu0 0.0
    %319 = vmatpush1.msra.mxu0 %v274
    %320 = vmatprep.subr.mxu0 0.0
    %321 = vmatpush1.msra.mxu0 %v273
    %322 = vmatprep.subr.mxu0 0.0
    %323 = vmatpush1.msra.mxu0 %v272
    %324 = vmatprep.subr.mxu0 0.0
    %325 = vmatpush1.msra.mxu0 %v271
    %326 = vmatprep.subr.mxu0 0.0
    %327 = vmatpush2.msra.mxu0 0.0
    %328 = vmatprep.subr.mxu0 0.0
    %329 = vmatpush2.msra.mxu0 0.0
    %330 = vmatprep.subr.mxu0 0.0
    %331 = vmatpush2.msra.mxu0 0.0
    %332 = vmatprep.subr.mxu0 0.0
    %333 = vmatpush2.msra.mxu0 0.0
    %334 = vmatprep.subr.mxu0 0.0
    %335 = vmatpush2.msra.mxu0 0.0
    %336 = vmatprep.subr.mxu0 0.0
    %337 = vmatpush2.msra.mxu0 0.0
    %338 = vmatprep.subr.mxu0 0.0
    %339 = vmatpush2.msra.mxu0 0.0
    %340 = vmatprep.subr.mxu0 0.0
    %341 = vmatpush2.msra.mxu0 0.0
    %342 = vmatprep.subr.mxu0 0.0
    %343 = vmatpush2.msra.mxu0 0.0
    %344 = vmatprep.subr.mxu0 0.0
    %345 = vmatpush2.msra.mxu0 0.0
    %346 = vmatprep.subr.mxu0 0.0
    %347 = vmatpush2.msra.mxu0 0.0
    %348 = vmatprep.subr.mxu0 0.0
    %349 = vmatpush2.msra.mxu0 0.0
    %350 = vmatprep.subr.mxu0 0.0
    %351 = vmatpush2.msra.mxu0 0.0
    %352 = vmatprep.subr.mxu0 0.0
    %353 = vmatpush2.msra.mxu0 0.0
    %354 = vmatprep.subr.mxu0 0.0
    %355 = vmatpush2.msra.mxu0 0.0
    %356 = vmatprep.subr.mxu0 0.0
    %357 = vmatpush2.msra.mxu0 0.0
    %358 = vmatprep.mubr.f32.mxu0 0.0
    %359 = vmatmul.mubr.f32.gmra.mxu0 %v269
    %v360 = vpop.f32.mrf.mxu0
    %v361 = vadd.f32 %v292, %v360
    %v362 = vpop.f32.mrf.mxu0
    %363 = vmatprep.mubr.f32.mxu0 0.0
    %364 = vmatmul.mubr.f32.gmra.mxu0 %v270
    %v365 = vpop.f32.mrf.mxu0
    %v366 = vadd.f32 %v292, %v365
    %v367 = vpop.f32.mrf.mxu0
    %368 = vdwg.mxu0
    %369 = vst [vmem:[#allocation10] sm:$0xff] %v361
    %370 = vst [vmem:[#allocation10 + $0x8] sm:$0xff] %v366
    // Predicated region
    $region46: #{tpu_custom_call.1} parent=1 // pred_check
      _
    $region47: #{tpu_custom_call.1} parent=1 // pred_check_branch
      %372 = sbr.rel (0) target = $region49
    $region48: #{tpu_custom_call.1} parent=1 // pred_region
      %s374 = ssub.s32 256, 256
      %375 = vsyncadd [#allocation4], %s374
      %s376 = sshll.u32 [#allocation10], 4
      %s377 = int_to_ptr.vmem [resolvable:$true] %s376
      %382 = dma.vmem_to_hbm [thread:$0]  %s377, 256, %s7, [#allocation4], 128, 128, 8
    $region49: #{tpu_custom_call.1} parent=1 // pred_fallthru
      _
    // Predicated region
    $region50: #{tpu_custom_call.1} parent=1 // pred_check
      _
    $region51: #{tpu_custom_call.1} parent=1 // pred_check_branch
      %384 = sbr.rel (0) target = $region53
    $region52: #{tpu_custom_call.1} parent=1 // pred_region
      %385 = dma.done [#allocation4], 256
    $region53: #{tpu_custom_call.1} parent=1 // pred_fallthru
      _
    %386 = vsyncpa [#allocation3], 1
    %387 = vsyncpa [#allocation6], 1
    %388 = vsyncpa [#allocation9], 1
    %389 = vsyncpa [#allocation4], 1

// kernel: tpu_custom_call.1
$region0: #{tpu_custom_call.1}
  #allocation0 [shape = 'u32[]', space=smem, size = 0x4, offset = 0x4, fixed_abs, tag = 'smem constant byte address 0x4 - core index']
  #allocation1 [shape = 'u32[144,128]{1,0:T(1,128)}', space=vmem, size = 0x12000, scoped, tag = 'internal scratch']
  %s0 = inlined_call_operand.hbm [shape: f32[16,32], index: 0, kind: input, shape index: {}]
  %s1 = inlined_call_operand.hbm [shape: bf16[32,128], index: 1, kind: input, shape index: {}]
  %s2 = inlined_call_operand.vmem [shape: f32[1,128], index: 2, kind: input, shape index: {}]
  %s3 = inlined_call_operand.hbm [shape: bf16[128,128], index: 3, kind: input, shape index: {}]
  %s4 = inlined_call_operand.vmem [shape: f32[1,128], index: 4, kind: input, shape index: {}]
  %s5 = inlined_call_operand.hbm [shape: f32[128,128], index: 5, kind: input, shape index: {}]
  %s6 = inlined_call_operand.vmem [shape: f32[1,128], index: 6, kind: input, shape index: {}]
  %s7 = inlined_call_operand.hbm [shape: f32[16,128], index: 7, kind: output, shape index: {}]
  %s8 = sld [smem:[#allocation0]]
  $region54: #{tpu_custom_call.1} parent=0
    _
  %s10 = ssub.s32 1, %s8
  %s11 = scalar_select 0, %s10, %s8
  $region1: #{tpu_custom_call.1} parent=0
    #allocation2 [shape = 'u8[8192]{0}', space=vmem, size = 0x2000, scoped, tag = 'input window, operand 0, single buffered']
    #allocation3 [shape = 's32[1]{0}', space=sflag, size = 0x4, scoped, tag = 'scoped memory for tpu_custom_call.1']
    #allocation4 [shape = 's32[1]{0}', space=sflag, size = 0x4, scoped, tag = 'scoped memory for tpu_custom_call.1']
    #allocation5 [shape = 'u8[8192]{0}', space=vmem, size = 0x2000, scoped, tag = 'input window, operand 1, single buffered']
    #allocation6 [shape = 's32[1]{0}', space=sflag, size = 0x4, scoped, tag = 'scoped memory for tpu_custom_call.1']
    #allocation7 [shape = 'u8[32768]{0}', space=vmem, size = 0x8000, scoped, tag = 'input window, operand 3, single buffered']
    #allocation8 [shape = 'u8[65536]{0}', space=vmem, size = 0x10000, scoped, tag = 'input window, operand 5, single buffered']
    #allocation9 [shape = 's32[1]{0}', space=sflag, size = 0x4, scoped, tag = 'scoped memory for tpu_custom_call.1']
    #allocation10 [shape = 'u8[8192]{0}', space=vmem, size = 0x2000, scoped, tag = 'output window, operand 0, single buffered']
    %12 = vsyncpa [#allocation3], 0
    %13 = vsyncpa [#allocation6], 0
    %14 = vsyncpa [#allocation9], 0
    %15 = vsyncpa [#allocation4], 0
    // Predicated region
    $region2: #{tpu_custom_call.1} parent=1 // pred_check
      _
    $region3: #{tpu_custom_call.1} parent=1 // pred_check_branch
      %17 = sbr.rel (0) target = $region5
    $region4: #{tpu_custom_call.1} parent=1 // pred_region
      %s19 = ssub.s32 256, 256
      %20 = vsyncadd [#allocation3], %s19
      %s21 = sshll.u32 [#allocation2], 4
      %s22 = int_to_ptr.vmem [resolvable:$true] %s21
      %27 = dma.hbm_to_vmem [thread:$0]  %s0, 256, %s22, [#allocation3], 128, 128, 8
    $region5: #{tpu_custom_call.1} parent=1 // pred_fallthru
      _
    // Predicated region
    $region6: #{tpu_custom_call.1} parent=1 // pred_check
      _
    $region7: #{tpu_custom_call.1} parent=1 // pred_check_branch
      %29 = sbr.rel (0) target = $region9
    $region8: #{tpu_custom_call.1} parent=1 // pred_region
      %s31 = ssub.s32 256, 256
      %32 = vsyncadd [#allocation6], %s31
      %s33 = sshll.u32 [#allocation5], 4
      %s34 = int_to_ptr.vmem [resolvable:$true] %s33
      %39 = dma.hbm_to_vmem [thread:$0]  %s1, 256, %s34, [#allocation6], 64, 64, 4
    $region9: #{tpu_custom_call.1} parent=1 // pred_fallthru
      _
    // Predicated region
    $region10: #{tpu_custom_call.1} parent=1 // pred_check
      _
    $region11: #{tpu_custom_call.1} parent=1 // pred_check_branch
      %41 = sbr.rel (0) target = $region13
    $region12: #{tpu_custom_call.1} parent=1 // pred_region
      _
    $region13: #{tpu_custom_call.1} parent=1 // pred_fallthru
      _
    // Predicated region
    $region14: #{tpu_custom_call.1} parent=1 // pred_check
      _
    $region15: #{tpu_custom_call.1} parent=1 // pred_check_branch
      %43 = sbr.rel (0) target = $region17
    $region16: #{tpu_custom_call.1} parent=1 // pred_region
      %s45 = ssub.s32 1024, 1024
      %46 = vsyncadd [#allocation6], %s45
      %s47 = sshll.u32 [#allocation7], 4
      %s48 = int_to_ptr.vmem [resolvable:$true] %s47
      %53 = dma.hbm_to_vmem [thread:$0]  %s3, 1024, %s48, [#allocation6], 64, 64, 4
    $region17: #{tpu_custom_call.1} parent=1 // pred_fallthru
      _
    // Predicated region
    $region18: #{tpu_custom_call.1} parent=1 // pred_check
      _
    $region19: #{tpu_custom_call.1} parent=1 // pred_check_branch
      %55 = sbr.rel (0) target = $region21
    $region20: #{tpu_custom_call.1} parent=1 // pred_region
      _
    $region21: #{tpu_custom_call.1} parent=1 // pred_fallthru
      _
    // Predicated region
    $region22: #{tpu_custom_call.1} parent=1 // pred_check
      _
    $region23: #{tpu_custom_call.1} parent=1 // pred_check_branch
      %57 = sbr.rel (0) target = $region25
    $region24: #{tpu_custom_call.1} parent=1 // pred_region
      %s59 = ssub.s32 2048, 2048
      %60 = vsyncadd [#allocation9], %s59
      %s61 = sshll.u32 [#allocation8], 4
      %s62 = int_to_ptr.vmem [resolvable:$true] %s61
      %67 = dma.hbm_to_vmem [thread:$0]  %s5, 2048, %s62, [#allocation9], 128, 128, 8
    $region25: #{tpu_custom_call.1} parent=1 // pred_fallthru
      _
    // Predicated region
    $region26: #{tpu_custom_call.1} parent=1 // pred_check
      _
    $region27: #{tpu_custom_call.1} parent=1 // pred_check_branch
      %69 = sbr.rel (0) target = $region29
    $region28: #{tpu_custom_call.1} parent=1 // pred_region
      _
    $region29: #{tpu_custom_call.1} parent=1 // pred_fallthru
      _
    // Predicated region
    $region30: #{tpu_custom_call.1} parent=1 // pred_check
      _
    $region31: #{tpu_custom_call.1} parent=1 // pred_check_branch
      %71 = sbr.rel (0) target = $region33
    $region32: #{tpu_custom_call.1} parent=1 // pred_region
      %72 = dma.done [#allocation3], 256
    $region33: #{tpu_custom_call.1} parent=1 // pred_fallthru
      _
    // Predicated region
    $region34: #{tpu_custom_call.1} parent=1 // pred_check
      _
    $region35: #{tpu_custom_call.1} parent=1 // pred_check_branch
      %74 = sbr.rel (0) target = $region37
    $region36: #{tpu_custom_call.1} parent=1 // pred_region
      %75 = dma.done [#allocation6], 256
    $region37: #{tpu_custom_call.1} parent=1 // pred_fallthru
      _
    // Predicated region
    $region38: #{tpu_custom_call.1} parent=1 // pred_check
      _
    $region39: #{tpu_custom_call.1} parent=1 // pred_check_branch
      %77 = sbr.rel (0) target = $region41
    $region40: #{tpu_custom_call.1} parent=1 // pred_region
      %78 = dma.done [#allocation6], 1024
    $region41: #{tpu_custom_call.1} parent=1 // pred_fallthru
      _
    // Predicated region
    $region42: #{tpu_custom_call.1} parent=1 // pred_check
      _
    $region43: #{tpu_custom_call.1} parent=1 // pred_check_branch
      %80 = sbr.rel (0) target = $region45
    $region44: #{tpu_custom_call.1} parent=1 // pred_region
      %81 = dma.done [#allocation9], 2048
    $region45: #{tpu_custom_call.1} parent=1 // pred_fallthru
      _
    %v83 = vld [vmem:[#allocation2] sm:$0xff]
    %v84 = vld [vmem:[#allocation2 + $0x8] sm:$0xff]
    %v85 = vpack.c.bf16 %v84, %v83
    %v86 = vld [vmem:[#allocation5] sm:$0xf]
    %v87 = vld [vmem:[#allocation5 + $0x4] sm:$0xf]
    %v88 = vld [vmem:[#allocation5 + $0x8] sm:$0xf]
    %v89 = vld [vmem:[#allocation5 + $0xc] sm:$0xf]
    %v90 = vld [vmem:[%s2] sm:$0x1]
    %v92 = vlaneseq
    %v93 = vshrl.u32 %v92, 7
    %v94 = vsub.s32 0, %v93
    %v95 = vrot.slane %v90, %v94
    %v101 = vunpack.c.l.b16 %v86
    %v102 = vunpack.c.l.b16 %v87
    %v103 = vunpack.c.l.b16 %v88
    %v104 = vunpack.c.l.b16 %v89
    %v105 = vpack.c.b16 %v102, %v101
    %v106 = vpack.c.b16 %v104, %v103
    %vm109 = vcmask 261120
    %v111 = vsel %vm109, %v85, 0
    %113 = vmatprep.subr.bf16.mxu0 0
    %114 = vmatpush1.bf16.msra.mxu0 0
    %115 = vmatprep.subr.bf16.mxu0 0
    %116 = vmatpush1.bf16.msra.mxu0 0
    %117 = vmatprep.subr.bf16.mxu0 0
    %118 = vmatpush1.bf16.msra.mxu0 0
    %119 = vmatprep.subr.bf16.mxu0 0
    %120 = vmatpush1.bf16.msra.mxu0 0
    %121 = vmatprep.subr.bf16.mxu0 0
    %122 = vmatpush1.bf16.msra.mxu0 0
    %123 = vmatprep.subr.bf16.mxu0 0
    %124 = vmatpush1.bf16.msra.mxu0 0
    %125 = vmatprep.subr.bf16.mxu0 0
    %126 = vmatpush1.bf16.msra.mxu0 %v106
    %127 = vmatprep.subr.bf16.mxu0 0
    %128 = vmatpush1.bf16.msra.mxu0 %v105
    %129 = vmatprep.subr.bf16.mxu0 0
    %130 = vmatpush2.bf16.msra.mxu0 0
    %131 = vmatprep.subr.bf16.mxu0 0
    %132 = vmatpush2.bf16.msra.mxu0 0
    %133 = vmatprep.subr.bf16.mxu0 0
    %134 = vmatpush2.bf16.msra.mxu0 0
    %135 = vmatprep.subr.bf16.mxu0 0
    %136 = vmatpush2.bf16.msra.mxu0 0
    %137 = vmatprep.subr.bf16.mxu0 0
    %138 = vmatpush2.bf16.msra.mxu0 0
    %139 = vmatprep.subr.bf16.mxu0 0
    %140 = vmatpush2.bf16.msra.mxu0 0
    %141 = vmatprep.subr.bf16.mxu0 0
    %142 = vmatpush2.bf16.msra.mxu0 0
    %143 = vmatprep.subr.bf16.mxu0 0
    %144 = vmatpush2.bf16.msra.mxu0 0
    %145 = vmatprep.mubr.bf16.mxu0 0
    %146 = vmatmul.mubr.bf16.gmra.mxu0 %v111
    %v147 = vpop.f32.mrf.mxu0
    %v148 = vadd.f32 %v95, %v147
    %v149 = vpop.f32.mrf.mxu0
    %v150 = vpop.f32.mrf.mxu0
    %v151 = vadd.f32 %v95, %v150
    %v152 = vpop.f32.mrf.mxu0
    %153 = vdwg.mxu0
    %v154 = vmax.f32 %v148, 0.0
    %v155 = vmax.f32 %v151, 0.0
    %v156 = vpack.c.bf16 %v155, %v154
    %v157 = vld [vmem:[#allocation7] sm:$0xf]
    %v158 = vld [vmem:[#allocation7 + $0x4] sm:$0xf]
    %v159 = vld [vmem:[#allocation7 + $0x8] sm:$0xf]
    %v160 = vld [vmem:[#allocation7 + $0xc] sm:$0xf]
    %v161 = vld [vmem:[#allocation7 + $0x10] sm:$0xf]
    %v162 = vld [vmem:[#allocation7 + $0x14] sm:$0xf]
    %v163 = vld [vmem:[#allocation7 + $0x18] sm:$0xf]
    %v164 = vld [vmem:[#allocation7 + $0x1c] sm:$0xf]
    %v165 = vld [vmem:[#allocation7 + $0x20] sm:$0xf]
    %v166 = vld [vmem:[#allocation7 + $0x24] sm:$0xf]
    %v167 = vld [vmem:[#allocation7 + $0x28] sm:$0xf]
    %v168 = vld [vmem:[#allocation7 + $0x2c] sm:$0xf]
    %v169 = vld [vmem:[#allocation7 + $0x30] sm:$0xf]
    %v170 = vld [vmem:[#allocation7 + $0x34] sm:$0xf]
    %v171 = vld [vmem:[#allocation7 + $0x38] sm:$0xf]
    %v172 = vld [vmem:[#allocation7 + $0x3c] sm:$0xf]
    %v173 = vld [vmem:[%s4] sm:$0x1]
    %v175 = vlaneseq
    %v176 = vshrl.u32 %v175, 7
    %v177 = vsub.s32 0, %v176
    %v178 = vrot.slane %v173, %v177
    %v196 = vunpack.c.l.b16 %v157
    %v197 = vunpack.c.l.b16 %v158
    %v198 = vunpack.c.l.b16 %v159
    %v199 = vunpack.c.l.b16 %v160
    %v200 = vunpack.c.l.b16 %v161
    %v201 = vunpack.c.l.b16 %v162
    %v202 = vunpack.c.l.b16 %v163
    %v203 = vunpack.c.l.b16 %v164
    %v204 = vunpack.c.l.b16 %v165
    %v205 = vunpack.c.l.b16 %v166
    %v206 = vunpack.c.l.b16 %v167
    %v207 = vunpack.c.l.b16 %v168
    %v208 = vunpack.c.l.b16 %v169
    %v209 = vunpack.c.l.b16 %v170
    %v210 = vunpack.c.l.b16 %v171
    %v211 = vunpack.c.l.b16 %v172
    %v212 = vpack.c.b16 %v197, %v196
    %v213 = vpack.c.b16 %v199, %v198
    %v214 = vpack.c.b16 %v201, %v200
    %v215 = vpack.c.b16 %v203, %v202
    %v216 = vpack.c.b16 %v205, %v204
    %v217 = vpack.c.b16 %v207, %v206
    %v218 = vpack.c.b16 %v209, %v208
    %v219 = vpack.c.b16 %v211, %v210
    %228 = vmatprep.subr.bf16.mxu0 0
    %229 = vmatpush1.bf16.msra.mxu0 %v219
    %230 = vmatprep.subr.bf16.mxu0 0
    %231 = vmatpush1.bf16.msra.mxu0 %v218
    %232 = vmatprep.subr.bf16.mxu0 0
    %233 = vmatpush1.bf16.msra.mxu0 %v217
    %234 = vmatprep.subr.bf16.mxu0 0
    %235 = vmatpush1.bf16.msra.mxu0 %v216
    %236 = vmatprep.subr.bf16.mxu0 0
    %237 = vmatpush1.bf16.msra.mxu0 %v215
    %238 = vmatprep.subr.bf16.mxu0 0
    %239 = vmatpush1.bf16.msra.mxu0 %v214
    %240 = vmatprep.subr.bf16.mxu0 0
    %241 = vmatpush1.bf16.msra.mxu0 %v213
    %242 = vmatprep.subr.bf16.mxu0 0
    %243 = vmatpush1.bf16.msra.mxu0 %v212
    %244 = vmatprep.subr.bf16.mxu0 0
    %245 = vmatpush2.bf16.msra.mxu0 0
    %246 = vmatprep.subr.bf16.mxu0 0
    %247 = vmatpush2.bf16.msra.mxu0 0
    %248 = vmatprep.subr.bf16.mxu0 0
    %249 = vmatpush2.bf16.msra.mxu0 0
    %250 = vmatprep.subr.bf16.mxu0 0
    %251 = vmatpush2.bf16.msra.mxu0 0
    %252 = vmatprep.subr.bf16.mxu0 0
    %253 = vmatpush2.bf16.msra.mxu0 0
    %254 = vmatprep.subr.bf16.mxu0 0
    %255 = vmatpush2.bf16.msra.mxu0 0
    %256 = vmatprep.subr.bf16.mxu0 0
    %257 = vmatpush2.bf16.msra.mxu0 0
    %258 = vmatprep.subr.bf16.mxu0 0
    %259 = vmatpush2.bf16.msra.mxu0 0
    %260 = vmatprep.mubr.bf16.mxu0 0
    %261 = vmatmul.mubr.bf16.gmra.mxu0 %v156
    %v262 = vpop.f32.mrf.mxu0
    %v263 = vadd.f32 %v178, %v262
    %v264 = vpop.f32.mrf.mxu0
    %v265 = vpop.f32.mrf.mxu0
    %v266 = vadd.f32 %v178, %v265
    %v267 = vpop.f32.mrf.mxu0
    %268 = vdwg.mxu0
    %v269 = vmax.f32 %v263, 0.0
    %v270 = vmax.f32 %v266, 0.0
    %v271 = vld [vmem:[#allocation8] sm:$0xff]
    %v272 = vld [vmem:[#allocation8 + $0x8] sm:$0xff]
    %v273 = vld [vmem:[#allocation8 + $0x10] sm:$0xff]
    %v274 = vld [vmem:[#allocation8 + $0x18] sm:$0xff]
    %v275 = vld [vmem:[#allocation8 + $0x20] sm:$0xff]
    %v276 = vld [vmem:[#allocation8 + $0x28] sm:$0xff]
    %v277 = vld [vmem:[#allocation8 + $0x30] sm:$0xff]
    %v278 = vld [vmem:[#allocation8 + $0x38] sm:$0xff]
    %v279 = vld [vmem:[#allocation8 + $0x40] sm:$0xff]
    %v280 = vld [vmem:[#allocation8 + $0x48] sm:$0xff]
    %v281 = vld [vmem:[#allocation8 + $0x50] sm:$0xff]
    %v282 = vld [vmem:[#allocation8 + $0x58] sm:$0xff]
    %v283 = vld [vmem:[#allocation8 + $0x60] sm:$0xff]
    %v284 = vld [vmem:[#allocation8 + $0x68] sm:$0xff]
    %v285 = vld [vmem:[#allocation8 + $0x70] sm:$0xff]
    %v286 = vld [vmem:[#allocation8 + $0x78] sm:$0xff]
    %v287 = vld [vmem:[%s6] sm:$0x1]
    %v289 = vlaneseq
    %v290 = vshrl.u32 %v289, 7
    %v291 = vsub.s32 0, %v290
    %v292 = vrot.slane %v287, %v291
    %294 = vmatprep.subr.mxu0 0.0
    %295 = vmatpush1.msra.mxu0 %v286
    %296 = vmatprep.subr.mxu0 0.0
    %297 = vmatpush1.msra.mxu0 %v285
    %298 = vmatprep.subr.mxu0 0.0
    %299 = vmatpush1.msra.mxu0 %v284
    %300 = vmatprep.subr.mxu0 0.0
    %301 = vmatpush1.msra.mxu0 %v283
    %302 = vmatprep.subr.mxu0 0.0
    %303 = vmatpush1.msra.mxu0 %v282
    %304 = vmatprep.subr.mxu0 0.0
    %305 = vmatpush1.msra.mxu0 %v281
    %306 = vmatprep.subr.mxu0 0.0
    %307 = vmatpush1.msra.mxu0 %v280
    %308 = vmatprep.subr.mxu0 0.0
    %309 = vmatpush1.msra.mxu0 %v279
    %310 = vmatprep.subr.mxu0 0.0
    %311 = vmatpush1.msra.mxu0 %v278
    %312 = vmatprep.subr.mxu0 0.0
    %313 = vmatpush1.msra.mxu0 %v277
    %314 = vmatprep.subr.mxu0 0.0
    %315 = vmatpush1.msra.mxu0 %v276
    %316 = vmatprep.subr.mxu0 0.0
    %317 = vmatpush1.msra.mxu0 %v275
    %318 = vmatprep.subr.mxu0 0.0
    %319 = vmatpush1.msra.mxu0 %v274
    %320 = vmatprep.subr.mxu0 0.0
    %321 = vmatpush1.msra.mxu0 %v273
    %322 = vmatprep.subr.mxu0 0.0
    %323 = vmatpush1.msra.mxu0 %v272
    %324 = vmatprep.subr.mxu0 0.0
    %325 = vmatpush1.msra.mxu0 %v271
    %326 = vmatprep.subr.mxu0 0.0
    %327 = vmatpush2.msra.mxu0 0.0
    %328 = vmatprep.subr.mxu0 0.0
    %329 = vmatpush2.msra.mxu0 0.0
    %330 = vmatprep.subr.mxu0 0.0
    %331 = vmatpush2.msra.mxu0 0.0
    %332 = vmatprep.subr.mxu0 0.0
    %333 = vmatpush2.msra.mxu0 0.0
    %334 = vmatprep.subr.mxu0 0.0
    %335 = vmatpush2.msra.mxu0 0.0
    %336 = vmatprep.subr.mxu0 0.0
    %337 = vmatpush2.msra.mxu0 0.0
    %338 = vmatprep.subr.mxu0 0.0
    %339 = vmatpush2.msra.mxu0 0.0
    %340 = vmatprep.subr.mxu0 0.0
    %341 = vmatpush2.msra.mxu0 0.0
    %342 = vmatprep.subr.mxu0 0.0
    %343 = vmatpush2.msra.mxu0 0.0
    %344 = vmatprep.subr.mxu0 0.0
    %345 = vmatpush2.msra.mxu0 0.0
    %346 = vmatprep.subr.mxu0 0.0
    %347 = vmatpush2.msra.mxu0 0.0
    %348 = vmatprep.subr.mxu0 0.0
    %349 = vmatpush2.msra.mxu0 0.0
    %350 = vmatprep.subr.mxu0 0.0
    %351 = vmatpush2.msra.mxu0 0.0
    %352 = vmatprep.subr.mxu0 0.0
    %353 = vmatpush2.msra.mxu0 0.0
    %354 = vmatprep.subr.mxu0 0.0
    %355 = vmatpush2.msra.mxu0 0.0
    %356 = vmatprep.subr.mxu0 0.0
    %357 = vmatpush2.msra.mxu0 0.0
    %358 = vmatprep.mubr.f32.mxu0 0.0
    %359 = vmatmul.mubr.f32.gmra.mxu0 %v269
    %v360 = vpop.f32.mrf.mxu0
    %v361 = vadd.f32 %v292, %v360
    %v362 = vpop.f32.mrf.mxu0
    %363 = vmatprep.mubr.f32.mxu0 0.0
    %364 = vmatmul.mubr.f32.gmra.mxu0 %v270
    %v365 = vpop.f32.mrf.mxu0
    %v366 = vadd.f32 %v292, %v365
    %v367 = vpop.f32.mrf.mxu0
    %368 = vdwg.mxu0
    %369 = vst [vmem:[#allocation10] sm:$0xff] %v361
    %370 = vst [vmem:[#allocation10 + $0x8] sm:$0xff] %v366
    // Predicated region
    $region46: #{tpu_custom_call.1} parent=1 // pred_check
      _
    $region47: #{tpu_custom_call.1} parent=1 // pred_check_branch
      %372 = sbr.rel (0) target = $region49
    $region48: #{tpu_custom_call.1} parent=1 // pred_region
      %s374 = ssub.s32 256, 256
      %375 = vsyncadd [#allocation4], %s374
      %s376 = sshll.u32 [#allocation10], 4
      %s377 = int_to_ptr.vmem [resolvable:$true] %s376
      %382 = dma.vmem_to_hbm [thread:$0]  %s377, 256, %s7, [#allocation4], 128, 128, 8
    $region49: #{tpu_custom_call.1} parent=1 // pred_fallthru
      _
    // Predicated region
    $region50: #{tpu_custom_call.1} parent=1 // pred_check
      _
    $region51: #{tpu_custom_call.1} parent=1 // pred_check_branch
      %384 = sbr.rel (0) target = $region53
    $region52: #{tpu_custom_call.1} parent=1 // pred_region
      %385 = dma.done [#allocation4], 256
    $region53: #{tpu_custom_call.1} parent=1 // pred_fallthru
      _
    %386 = vsyncpa [#allocation3], 1
    %387 = vsyncpa [#allocation6], 1
    %388 = vsyncpa [#allocation9], 1
    %389 = vsyncpa [#allocation4], 1

</llo_original>
